<compile_context>
chip_gen: v7x
topology: tpu7x:2x2x1
jax: 0.10.0
libtpu: 0.0.40
codegen_flags: <defaults>
</compile_context>

<pallas_src>
import math
from functools import partial

import jax
import jax.numpy as jnp
from jax import lax
from jax.experimental import pallas as pl
from jax.experimental.pallas import tpu as pltpu


_MAX_BATCH_FOLD = 8        # static unroll bound for channels_first batch fold
_MAX_PACK_K = 8            # static unroll bound for channels_last lane packing


def _cdiv(a, b):
    return -(-a // b)


def _round_up(a, m):
    return _cdiv(a, m) * m


# ---------------------------------------------------------------------------
# Generation-aware configuration (block budget, vmem limit, TensorCore count).
# ---------------------------------------------------------------------------
_CFG_CACHE = None


def _tpu_config():
    """Returns (target_block_bytes, vmem_limit_bytes, num_tensorcores)."""
    global _CFG_CACHE
    if _CFG_CACHE is None:
        # Conservative defaults (safe on every generation): 4 MiB blocks,
        # 32 MiB scoped VMEM, assume 2 TensorCores so the grid never
        # collapses to one step on v7x.  On a 1-TC chip the extra grid steps
        # cost ~0.35 us each — negligible.
        target_block = 4 * 1024 * 1024
        vmem_limit = 32 * 1024 * 1024
        num_cores = 2
        try:
            info = pltpu.get_tpu_info()
            vmem_cap = int(getattr(info, "vmem_capacity_bytes", 64 << 20))
            if vmem_cap >= (100 << 20):
                # v5e / v6e: 128 MiB physical VMEM, single TensorCore.
                target_block = 8 * 1024 * 1024
                vmem_limit = 64 * 1024 * 1024
                num_cores = 1
        except Exception:
            pass
        _CFG_CACHE = (target_block, vmem_limit, num_cores)
    return _CFG_CACHE


def _pick_row_tile(n_rows, row_bytes, cfg):
    """Rows per block for a (rows, width) layout; rows aligned to 8 sublanes."""
    target_block, _, num_cores = cfg
    align = 8
    n_pad = _round_up(max(n_rows, 1), align)
    # Largest tile fitting the per-block byte budget.
    tile = max(align, (target_block // max(row_bytes, 1)) // align * align)
    # Aim for ~2 grid steps per TensorCore while blocks stay >= 512 KiB.
    per_step = _round_up(_cdiv(n_rows, 2 * num_cores), align)
    if per_step * row_bytes >= 512 * 1024:
        tile = min(tile, per_step)
    # On 2-TC chips never collapse to a single grid step if avoidable.
    if num_cores > 1:
        split = _round_up(_cdiv(n_rows, num_cores), align)
        if split < n_pad:
            tile = min(tile, split)
    return min(tile, n_pad)


def _pick_cf_tiles(bsz, c, s, itemsize, cfg):
    """(batch_fold, spatial_tile) for the channels_first (B, C, S) kernel."""
    target_block, _, num_cores = cfg
    c_pad = _round_up(max(c, 1), 8)
    s_pad = _round_up(max(s, 1), 128)
    plane_bytes = c_pad * s_pad * itemsize

    if plane_bytes <= target_block:
        # Small (C, S) planes: fold several batch elements into one block so
        # each grid step moves a large, mostly contiguous chunk of HBM.
        tile_s = s_pad
        bt = max(1, min(bsz, _MAX_BATCH_FOLD, target_block // plane_bytes))
        per_step = _cdiv(bsz, 2 * num_cores)
        if per_step * plane_bytes >= 512 * 1024:
            bt = min(bt, max(per_step, 1))
        # On 2-TC chips avoid a single-step grid when the data allows >= 2.
        if num_cores > 1 and _cdiv(bsz, bt) < num_cores:
            if bsz >= num_cores:
                bt = _cdiv(bsz, num_cores)
            elif s > 128:
                tile_s = _round_up(_cdiv(s, num_cores), 128)
        # Keep the leading block dim an exact divisor of the batch.
        while bsz % bt:
            bt -= 1
    else:
        # One batch element per block; tile the spatial (lane-dense) axis.
        bt = 1
        col_bytes = c_pad * itemsize
        tile_s = max(128, (target_block // max(col_bytes, 1)) // 128 * 128)
        want_spatial_steps = _cdiv(2 * num_cores, max(bsz, 1))
        if want_spatial_steps > 1:
            cap = _round_up(_cdiv(s, want_spatial_steps), 128)
            if cap * col_bytes >= 512 * 1024:
                tile_s = min(tile_s, cap)
        tile_s = min(tile_s, s_pad)
    return bt, tile_s


# ---------------------------------------------------------------------------
# channels_last: normalize over the last axis of a (N, C) view.
# ---------------------------------------------------------------------------
def _ln_lastdim_kernel(x_ref, w_ref, b_ref, o_ref, *, eps):
    x = x_ref[...].astype(jnp.float32)                  # (TILE_R, C)
    mean = jnp.mean(x, axis=-1, keepdims=True)
    xc = x - mean
    var = jnp.mean(xc * xc, axis=-1, keepdims=True)     # biased variance
    inv = lax.rsqrt(var + eps)                          # EUP, effectively free
    w = w_ref[...].astype(jnp.float32)                  # (1, C)
    b = b_ref[...].astype(jnp.float32)
    o_ref[...] = (xc * inv * w + b).astype(o_ref.dtype)


def _ln_packed_lastdim_kernel(x_ref, w_ref, b_ref, o_ref, *, eps, c, k):
    # Each lane row packs k logical rows of width C (k*C % 128 == 0), so the
    # HBM<->VMEM DMAs are fully contiguous and the final store is lane-dense.
    x = x_ref[...].astype(jnp.float32)                  # (TILE_R, k*C)
    w = w_ref[...].astype(jnp.float32)                  # (1, C)
    b = b_ref[...].astype(jnp.float32)
    parts = []
    for s in range(k):                                  # small static unroll
        xs = x[:, s * c:(s + 1) * c]                    # (TILE_R, C)
        mean = jnp.mean(xs, axis=-1, keepdims=True)
        xc = xs - mean
        var = jnp.mean(xc * xc, axis=-1, keepdims=True)
        inv = lax.rsqrt(var + eps)
        parts.append(xc * inv * w + b)
    o_ref[...] = jnp.concatenate(parts, axis=-1).astype(o_ref.dtype)


def _layernorm_lastdim(x2d, weight, bias, eps):
    n, c = x2d.shape
    cfg = _tpu_config()
    _, vmem_limit, _ = cfg
    itemsize = x2d.dtype.itemsize

    # Lane-packing factor: smallest k with k*C a multiple of 128.
    k = 128 // math.gcd(c, 128)
    if 1 < k <= _MAX_PACK_K and k * c <= 1024 and n % k == 0:
        kc = k * c
        rows = n // k
        xp = x2d.reshape(rows, kc)                      # contiguous, free
        tile = _pick_row_tile(rows, kc * itemsize, cfg)
        out = pl.pallas_call(
            partial(_ln_packed_lastdim_kernel, eps=eps, c=c, k=k),
            out_shape=jax.ShapeDtypeStruct((rows, kc), x2d.dtype),
            grid_spec=pltpu.PrefetchScalarGridSpec(
                num_scalar_prefetch=0,
                grid=(pl.cdiv(rows, tile),),
                in_specs=[
                    pl.BlockSpec((tile, kc), lambda i: (i, 0)),
                    pl.BlockSpec((1, c), lambda i: (0, 0)),
                    pl.BlockSpec((1, c), lambda i: (0, 0)),
                ],
                out_specs=pl.BlockSpec((tile, kc), lambda i: (i, 0)),
            ),
            compiler_params=pltpu.CompilerParams(
                dimension_semantics=("parallel",),
                vmem_limit_bytes=vmem_limit,
            ),
        )(xp, weight.reshape(1, c), bias.reshape(1, c))
        return out.reshape(n, c)

    # Fallback: C already a multiple of 128, or N not divisible by k.
    row_bytes = _round_up(c, 128) * itemsize
    tile = _pick_row_tile(n, row_bytes, cfg)
    return pl.pallas_call(
        partial(_ln_lastdim_kernel, eps=eps),
        out_shape=jax.ShapeDtypeStruct((n, c), x2d.dtype),
        grid_spec=pltpu.PrefetchScalarGridSpec(
            num_scalar_prefetch=0,
            grid=(pl.cdiv(n, tile),),
            in_specs=[
                pl.BlockSpec((tile, c), lambda i: (i, 0)),
                pl.BlockSpec((1, c), lambda i: (0, 0)),
                pl.BlockSpec((1, c), lambda i: (0, 0)),
            ],
            out_specs=pl.BlockSpec((tile, c), lambda i: (i, 0)),
        ),
        compiler_params=pltpu.CompilerParams(
            dimension_semantics=("parallel",),
            vmem_limit_bytes=vmem_limit,
        ),
    )(x2d, weight.reshape(1, c), bias.reshape(1, c))


# ---------------------------------------------------------------------------
# channels_first: normalize over the channel axis of a native (B, C, S) view.
# Channels live in sublanes, spatial stays lane-dense; no transposes at all.
# Multiple batch elements are folded into one block (static small unroll).
# ---------------------------------------------------------------------------
def _ln_channels_first_kernel(x_ref, w_ref, b_ref, o_ref, *, eps):
    w = w_ref[0].astype(jnp.float32)                    # (C, 1)
    b = b_ref[0].astype(jnp.float32)
    for bi in range(x_ref.shape[0]):                    # static fold, <= 8
        x = x_ref[bi].astype(jnp.float32)               # (C, TILE_S)
        mean = jnp.mean(x, axis=0, keepdims=True)       # (1, TILE_S)
        xc = x - mean
        var = jnp.mean(xc * xc, axis=0, keepdims=True)  # biased variance
        inv = lax.rsqrt(var + eps)
        o_ref[bi] = (xc * inv * w + b).astype(o_ref.dtype)


def _layernorm_channels_first(x3d, weight, bias, eps):
    bsz, c, s = x3d.shape
    cfg = _tpu_config()
    _, vmem_limit, _ = cfg
    bt, tile_s = _pick_cf_tiles(bsz, c, s, x3d.dtype.itemsize, cfg)
    return pl.pallas_call(
        partial(_ln_channels_first_kernel, eps=eps),
        out_shape=jax.ShapeDtypeStruct((bsz, c, s), x3d.dtype),
        grid_spec=pltpu.PrefetchScalarGridSpec(
            num_scalar_prefetch=0,
            grid=(pl.cdiv(bsz, bt), pl.cdiv(s, tile_s)),
            in_specs=[
                pl.BlockSpec((bt, c, tile_s), lambda b, j: (b, 0, j)),
                pl.BlockSpec((1, c, 1), lambda b, j: (0, 0, 0)),
                pl.BlockSpec((1, c, 1), lambda b, j: (0, 0, 0)),
            ],
            out_specs=pl.BlockSpec((bt, c, tile_s), lambda b, j: (b, 0, j)),
        ),
        compiler_params=pltpu.CompilerParams(
            dimension_semantics=("parallel", "parallel"),
            vmem_limit_bytes=vmem_limit,
        ),
    )(x3d, weight.reshape(1, c, 1), bias.reshape(1, c, 1))


# ---------------------------------------------------------------------------
# Module wrapper (same semantics as BFMMorph's LayerNorm).
# ---------------------------------------------------------------------------
class LayerNormPallas:
    """JAX/Pallas port of BFMMorph.LayerNorm (channels_last / channels_first)."""

    def __init__(self, normalized_shape, eps=1e-6, data_format="channels_last",
                 weight=None, bias=None):
        if data_format not in ("channels_last", "channels_first"):
            raise NotImplementedError
        self.eps = float(eps)
        self.data_format = data_format
        self.normalized_shape = (normalized_shape,)
        self.weight = (jnp.ones((normalized_shape,), jnp.float32)
                       if weight is None else jnp.asarray(weight))
        self.bias = (jnp.zeros((normalized_shape,), jnp.float32)
                     if bias is None else jnp.asarray(bias))

    def __call__(self, x):
        if self.data_format == "channels_last":
            c = x.shape[-1]
            assert c == self.weight.shape[0]
            n = 1
            for d in x.shape[:-1]:
                n *= d
            y2d = _layernorm_lastdim(x.reshape(n, c), self.weight, self.bias,
                                     self.eps)
            return y2d.reshape(x.shape)
        else:  # channels_first: (B, C, *spatial), normalize over axis 1
            c = x.shape[1]
            assert c == self.weight.shape[0]
            bsz = x.shape[0]
            s = 1
            for d in x.shape[2:]:
                s *= d
            # contiguous reshape (no data movement), kernel works in-layout
            y3d = _layernorm_channels_first(x.reshape(bsz, c, s), self.weight,
                                            self.bias, self.eps)
            return y3d.reshape(x.shape)


# ---------------------------------------------------------------------------
# Pure-JAX references (mirror the torch forward exactly).
# ---------------------------------------------------------------------------
def _ref_channels_last(x, w, b, eps):
    mean = jnp.mean(x, axis=-1, keepdims=True)
    var = jnp.mean((x - mean) ** 2, axis=-1, keepdims=True)
    return (x - mean) / jnp.sqrt(var + eps) * w + b


def _ref_channels_first(x, w, b, eps):
    u = jnp.mean(x, axis=1, keepdims=True)
    s = jnp.mean((x - u) ** 2, axis=1, keepdims=True)
    xn = (x - u) / jnp.sqrt(s + eps)
    shp = (1, -1) + (1,) * (x.ndim - 2)
    return w.reshape(shp) * xn + b.reshape(shp)


# TODO(synk): only the LayerNorm blocks of BFMMorph are implemented here; the
# Mamba SSM, Conv3d / correlation / grid_sample stages have no clean Pallas
# port in this script.

if __name__ == "__main__":
    key = jax.random.PRNGKey(0)
    keys = jax.random.split(key, 15)
    eps = 1e-6

    # ---- channels_last, C = 96 (module embed_dim), N divisible by 4 -> packed
    C = 96
    x = jax.random.normal(keys[0], (2, 66, C), jnp.float32)        # 132 rows
    w = 1.0 + 0.1 * jax.random.normal(keys[1], (C,), jnp.float32)
    b = 0.1 * jax.random.normal(keys[2], (C,), jnp.float32)
    ln = LayerNormPallas(C, eps=eps, data_format="channels_last", weight=w, bias=b)
    y = jax.block_until_ready(ln(x))
    assert jnp.allclose(y, _ref_channels_last(x, w, b, eps), atol=1e-5, rtol=1e-5)

    # ---- channels_last, C = 96 but N % 4 != 0 -> unpacked fallback ----
    x = jax.random.normal(keys[3], (2, 65, C), jnp.float32)        # 130 rows
    y = jax.block_until_ready(ln(x))
    assert jnp.allclose(y, _ref_channels_last(x, w, b, eps), atol=1e-5, rtol=1e-5)

    # ---- channels_last, small C = 32 -> packed (k*C = 128) ----
    C = 32
    x = jax.random.normal(keys[4], (2, 8, 9, C), jnp.float32)      # 144 rows
    w = 1.0 + 0.1 * jax.random.normal(keys[5], (C,), jnp.float32)
    b = 0.1 * jax.random.normal(keys[6], (C,), jnp.float32)
    ln = LayerNormPallas(C, eps=eps, data_format="channels_last", weight=w, bias=b)
    y = jax.block_until_ready(ln(x))
    assert jnp.allclose(y, _ref_channels_last(x, w, b, eps), atol=1e-5, rtol=1e-5)

    # ---- channels_first, C = 96, 3-D volume with S = 120 (masked lanes) ----
    C = 96
    x = jax.random.normal(keys[7], (2, C, 4, 6, 5), jnp.float32)
    w = 1.0 + 0.1 * jax.random.normal(keys[8], (C,), jnp.float32)
    b = 0.1 * jax.random.normal(keys[9], (C,), jnp.float32)
    ln = LayerNormPallas(C, eps=eps, data_format="channels_first", weight=w, bias=b)
    y = jax.block_until_ready(ln(x))
    assert jnp.allclose(y, _ref_channels_first(x, w, b, eps), atol=1e-5, rtol=1e-5)

    # ---- channels_first, tiny C = 4, B = 4, 8^3 volume (batch folding) ----
    C = 4
    x = jax.random.normal(keys[10], (4, C, 8, 8, 8), jnp.float32)
    w = 1.0 + 0.1 * jax.random.normal(keys[11], (C,), jnp.float32)
    b = 0.1 * jax.random.normal(keys[12], (C,), jnp.float32)
    ln = LayerNormPallas(C, eps=eps, data_format="channels_first", weight=w, bias=b)
    y = jax.block_until_ready(ln(x))
    assert jnp.allclose(y, _ref_channels_first(x, w, b, eps), atol=1e-5, rtol=1e-5)

    print("KERNEL_OK")
</pallas_src>

<mosaic_0001>
module attributes {stable_mosaic.version = 11 : i64} {
  func.func @_ln_packed_lastdim_kernel(%arg0: i32, %arg1: memref<24x384xf32, #tpu.memory_space<vmem>>, %arg2: memref<1x96xf32, #tpu.memory_space<vmem>>, %arg3: memref<1x96xf32, #tpu.memory_space<vmem>>, %arg4: memref<24x384xf32, #tpu.memory_space<vmem>>) attributes {dimension_semantics = [#tpu.dimension_semantics<parallel>], iteration_bounds = array<i64: 2>, scalar_prefetch = 0 : i64, scratch_operands = 0 : i64, tpu.core_type = #tpu.core_type<tc>, window_params = [{transform_indices = @transform_0, window_bounds = array<i64: 24, 384>}, {pipeline_mode = #tpu.pipeline_mode<synchronous>, transform_indices = @transform_1, window_bounds = array<i64: 1, 96>}, {pipeline_mode = #tpu.pipeline_mode<synchronous>, transform_indices = @transform_2, window_bounds = array<i64: 1, 96>}, {transform_indices = @transform_3, window_bounds = array<i64: 24, 384>}]} {
    %c0 = arith.constant 0 : index
    %c0_0 = arith.constant 0 : index
    %0 = vector.load %arg1[%c0, %c0_0] : memref<24x384xf32, #tpu.memory_space<vmem>>, vector<24x384xf32>
    %c0_1 = arith.constant 0 : index
    %c0_2 = arith.constant 0 : index
    %1 = vector.load %arg2[%c0_1, %c0_2] : memref<1x96xf32, #tpu.memory_space<vmem>>, vector<1x96xf32>
    %c0_3 = arith.constant 0 : index
    %c0_4 = arith.constant 0 : index
    %2 = vector.load %arg3[%c0_3, %c0_4] : memref<1x96xf32, #tpu.memory_space<vmem>>, vector<1x96xf32>
    %3 = vector.extract_strided_slice %0 {offsets = [0, 0], sizes = [24, 96], strides = [1, 1]} : vector<24x384xf32> to vector<24x96xf32>
    %cst = arith.constant dense<0.000000e+00> : vector<24xf32>
    %4 = vector.multi_reduction <add>, %3, %cst [1] : vector<24x96xf32> to vector<24xf32>
    %5 = vector.shape_cast %4 : vector<24xf32> to vector<24x1xf32>
    %cst_5 = arith.constant 9.600000e+01 : f32
    %6 = vector.broadcast %cst_5 : f32 to vector<24x1xf32>
    %7 = arith.divf %5, %6 : vector<24x1xf32>
    %8 = vector.broadcast %7 : vector<24x1xf32> to vector<24x96xf32>
    %9 = arith.subf %3, %8 : vector<24x96xf32>
    %10 = arith.mulf %9, %9 : vector<24x96xf32>
    %cst_6 = arith.constant dense<0.000000e+00> : vector<24xf32>
    %11 = vector.multi_reduction <add>, %10, %cst_6 [1] : vector<24x96xf32> to vector<24xf32>
    %12 = vector.shape_cast %11 : vector<24xf32> to vector<24x1xf32>
    %cst_7 = arith.constant 9.600000e+01 : f32
    %13 = vector.broadcast %cst_7 : f32 to vector<24x1xf32>
    %14 = arith.divf %12, %13 : vector<24x1xf32>
    %cst_8 = arith.constant 9.99999997E-7 : f32
    %15 = vector.broadcast %cst_8 : f32 to vector<24x1xf32>
    %16 = arith.addf %14, %15 : vector<24x1xf32>
    %17 = math.rsqrt %16 : vector<24x1xf32>
    %18 = vector.broadcast %17 : vector<24x1xf32> to vector<24x96xf32>
    %19 = arith.mulf %9, %18 : vector<24x96xf32>
    %20 = vector.broadcast %1 : vector<1x96xf32> to vector<24x96xf32>
    %21 = arith.mulf %19, %20 : vector<24x96xf32>
    %22 = vector.broadcast %2 : vector<1x96xf32> to vector<24x96xf32>
    %23 = arith.addf %21, %22 : vector<24x96xf32>
    %24 = vector.extract_strided_slice %0 {offsets = [0, 96], sizes = [24, 96], strides = [1, 1]} : vector<24x384xf32> to vector<24x96xf32>
    %cst_9 = arith.constant dense<0.000000e+00> : vector<24xf32>
    %25 = vector.multi_reduction <add>, %24, %cst_9 [1] : vector<24x96xf32> to vector<24xf32>
    %26 = vector.shape_cast %25 : vector<24xf32> to vector<24x1xf32>
    %cst_10 = arith.constant 9.600000e+01 : f32
    %27 = vector.broadcast %cst_10 : f32 to vector<24x1xf32>
    %28 = arith.divf %26, %27 : vector<24x1xf32>
    %29 = vector.broadcast %28 : vector<24x1xf32> to vector<24x96xf32>
    %30 = arith.subf %24, %29 : vector<24x96xf32>
    %31 = arith.mulf %30, %30 : vector<24x96xf32>
    %cst_11 = arith.constant dense<0.000000e+00> : vector<24xf32>
    %32 = vector.multi_reduction <add>, %31, %cst_11 [1] : vector<24x96xf32> to vector<24xf32>
    %33 = vector.shape_cast %32 : vector<24xf32> to vector<24x1xf32>
    %cst_12 = arith.constant 9.600000e+01 : f32
    %34 = vector.broadcast %cst_12 : f32 to vector<24x1xf32>
    %35 = arith.divf %33, %34 : vector<24x1xf32>
    %cst_13 = arith.constant 9.99999997E-7 : f32
    %36 = vector.broadcast %cst_13 : f32 to vector<24x1xf32>
    %37 = arith.addf %35, %36 : vector<24x1xf32>
    %38 = math.rsqrt %37 : vector<24x1xf32>
    %39 = vector.broadcast %38 : vector<24x1xf32> to vector<24x96xf32>
    %40 = arith.mulf %30, %39 : vector<24x96xf32>
    %41 = vector.broadcast %1 : vector<1x96xf32> to vector<24x96xf32>
    %42 = arith.mulf %40, %41 : vector<24x96xf32>
    %43 = vector.broadcast %2 : vector<1x96xf32> to vector<24x96xf32>
    %44 = arith.addf %42, %43 : vector<24x96xf32>
    %45 = vector.extract_strided_slice %0 {offsets = [0, 192], sizes = [24, 96], strides = [1, 1]} : vector<24x384xf32> to vector<24x96xf32>
    %cst_14 = arith.constant dense<0.000000e+00> : vector<24xf32>
    %46 = vector.multi_reduction <add>, %45, %cst_14 [1] : vector<24x96xf32> to vector<24xf32>
    %47 = vector.shape_cast %46 : vector<24xf32> to vector<24x1xf32>
    %cst_15 = arith.constant 9.600000e+01 : f32
    %48 = vector.broadcast %cst_15 : f32 to vector<24x1xf32>
    %49 = arith.divf %47, %48 : vector<24x1xf32>
    %50 = vector.broadcast %49 : vector<24x1xf32> to vector<24x96xf32>
    %51 = arith.subf %45, %50 : vector<24x96xf32>
    %52 = arith.mulf %51, %51 : vector<24x96xf32>
    %cst_16 = arith.constant dense<0.000000e+00> : vector<24xf32>
    %53 = vector.multi_reduction <add>, %52, %cst_16 [1] : vector<24x96xf32> to vector<24xf32>
    %54 = vector.shape_cast %53 : vector<24xf32> to vector<24x1xf32>
    %cst_17 = arith.constant 9.600000e+01 : f32
    %55 = vector.broadcast %cst_17 : f32 to vector<24x1xf32>
    %56 = arith.divf %54, %55 : vector<24x1xf32>
    %cst_18 = arith.constant 9.99999997E-7 : f32
    %57 = vector.broadcast %cst_18 : f32 to vector<24x1xf32>
    %58 = arith.addf %56, %57 : vector<24x1xf32>
    %59 = math.rsqrt %58 : vector<24x1xf32>
    %60 = vector.broadcast %59 : vector<24x1xf32> to vector<24x96xf32>
    %61 = arith.mulf %51, %60 : vector<24x96xf32>
    %62 = vector.broadcast %1 : vector<1x96xf32> to vector<24x96xf32>
    %63 = arith.mulf %61, %62 : vector<24x96xf32>
    %64 = vector.broadcast %2 : vector<1x96xf32> to vector<24x96xf32>
    %65 = arith.addf %63, %64 : vector<24x96xf32>
    %66 = vector.extract_strided_slice %0 {offsets = [0, 288], sizes = [24, 96], strides = [1, 1]} : vector<24x384xf32> to vector<24x96xf32>
    %cst_19 = arith.constant dense<0.000000e+00> : vector<24xf32>
    %67 = vector.multi_reduction <add>, %66, %cst_19 [1] : vector<24x96xf32> to vector<24xf32>
    %68 = vector.shape_cast %67 : vector<24xf32> to vector<24x1xf32>
    %cst_20 = arith.constant 9.600000e+01 : f32
    %69 = vector.broadcast %cst_20 : f32 to vector<24x1xf32>
    %70 = arith.divf %68, %69 : vector<24x1xf32>
    %71 = vector.broadcast %70 : vector<24x1xf32> to vector<24x96xf32>
    %72 = arith.subf %66, %71 : vector<24x96xf32>
    %73 = arith.mulf %72, %72 : vector<24x96xf32>
    %cst_21 = arith.constant dense<0.000000e+00> : vector<24xf32>
    %74 = vector.multi_reduction <add>, %73, %cst_21 [1] : vector<24x96xf32> to vector<24xf32>
    %75 = vector.shape_cast %74 : vector<24xf32> to vector<24x1xf32>
    %cst_22 = arith.constant 9.600000e+01 : f32
    %76 = vector.broadcast %cst_22 : f32 to vector<24x1xf32>
    %77 = arith.divf %75, %76 : vector<24x1xf32>
    %cst_23 = arith.constant 9.99999997E-7 : f32
    %78 = vector.broadcast %cst_23 : f32 to vector<24x1xf32>
    %79 = arith.addf %77, %78 : vector<24x1xf32>
    %80 = math.rsqrt %79 : vector<24x1xf32>
    %81 = vector.broadcast %80 : vector<24x1xf32> to vector<24x96xf32>
    %82 = arith.mulf %72, %81 : vector<24x96xf32>
    %83 = vector.broadcast %1 : vector<1x96xf32> to vector<24x96xf32>
    %84 = arith.mulf %82, %83 : vector<24x96xf32>
    %85 = vector.broadcast %2 : vector<1x96xf32> to vector<24x96xf32>
    %86 = arith.addf %84, %85 : vector<24x96xf32>
    %87 = tpu.concatenate %23, %44, %65, %86 in 1 : vector<24x96xf32>, vector<24x96xf32>, vector<24x96xf32>, vector<24x96xf32> -> vector<24x384xf32>
    %c0_24 = arith.constant 0 : index
    %c0_25 = arith.constant 0 : index
    %88 = vector.load %arg4[%c0_24, %c0_25] : memref<24x384xf32, #tpu.memory_space<vmem>>, vector<24x384xf32>
    tpu.vector_store %arg4[%c0_24, %c0_25], %87 {strides = array<i32>} : memref<24x384xf32, #tpu.memory_space<vmem>>, vector<24x384xf32>,
    return
  }
  func.func @transform_0(%arg0: i32) -> (i32, i32) {
    %c0_i32 = arith.constant 0 : i32
    %c0_i32_0 = arith.constant 0 : i32
    return %arg0, %c0_i32 : i32, i32
  }
  func.func @transform_1(%arg0: i32) -> (i32, i32) {
    %c0_i32 = arith.constant 0 : i32
    %c0_i32_0 = arith.constant 0 : i32
    %c0_i32_1 = arith.constant 0 : i32
    return %c0_i32, %c0_i32_0 : i32, i32
  }
  func.func @transform_2(%arg0: i32) -> (i32, i32) {
    %c0_i32 = arith.constant 0 : i32
    %c0_i32_0 = arith.constant 0 : i32
    %c0_i32_1 = arith.constant 0 : i32
    return %c0_i32, %c0_i32_0 : i32, i32
  }
  func.func @transform_3(%arg0: i32) -> (i32, i32) {
    %c0_i32 = arith.constant 0 : i32
    %c0_i32_0 = arith.constant 0 : i32
    return %arg0, %c0_i32 : i32, i32
  }
}

</mosaic_0001>

<llo_original>
// kernel: tpu_custom_call.1
$region0: #{tpu_custom_call.1}
  #allocation0 [shape = 'u32[]', space=smem, size = 0x4, offset = 0x4, fixed_abs, tag = 'smem constant byte address 0x4 - core index']
  #allocation1 [shape = 'u32[144,128]{1,0:T(1,128)}', space=vmem, size = 0x12000, scoped, tag = 'internal scratch']
  %s0 = inlined_call_operand.hbm [shape: f32[33,384], index: 0, kind: input, shape index: {}]
  %s1 = inlined_call_operand.vmem [shape: f32[1,96], index: 1, kind: input, shape index: {}]
  %s2 = inlined_call_operand.vmem [shape: f32[1,96], index: 2, kind: input, shape index: {}]
  %s3 = inlined_call_operand.hbm [shape: f32[33,384], index: 3, kind: output, shape index: {}]
  %s4 = sld [smem:[#allocation0]]
  $region49: #{tpu_custom_call.1} parent=0
    _
  %s6 = ssub.s32 1, %s4
  %s7 = scalar_select 0, %s6, %s4
  $region1: #{tpu_custom_call.1} parent=0
    #allocation2 [shape = 'u8[73728]{0}', space=vmem, size = 0x12000, scoped, tag = 'input window, operand 0']
    #allocation3 [shape = 's32[2]{0}', space=sflag, size = 0x8, scoped, tag = 'scoped memory for tpu_custom_call.1']
    #allocation4 [shape = 's32[2]{0}', space=sflag, size = 0x8, scoped, tag = 'scoped memory for tpu_custom_call.1']
    #allocation5 [shape = 'u8[73728]{0}', space=vmem, size = 0x12000, scoped, tag = 'output window, operand 0']
    %8 = vsyncpa [#allocation3], 0
    %s9 = scalar_lea.sflag [#allocation3], 1
    %10 = vsyncpa %s9, 0
    %11 = vsyncpa [#allocation4], 0
    %s12 = scalar_lea.sflag [#allocation4], 1
    %13 = vsyncpa %s12, 0
    loop: start=0, step=1, limit=4
    $region2: #{tpu_custom_call.1} parent=1 // loop_pre_header
      _
    $region3: #{tpu_custom_call.1} parent=1 // loop_header
      %s15 = sphi 0, %s19
      %p16 = scmp.ge.s32.totalorder %s15, 4
      %s25 = sphi 0, %s27
      %s28 = sphi 0, %s25
      %s29 = sphi 0, %s28
      %s45 = sphi 0, %s29
      %s49 = sphi 0, %s49
      %s51 = sphi 0, %s49
      %s52 = sphi 0, %s51
      %s66 = sphi 0, %s52
      %s70 = sphi 0, %s70
      %s72 = sphi 0, %s70
      %s73 = sphi 0, %s72
      %s87 = sphi 0, %s73
      %s93 = sphi 0, %s95
      %s96 = sphi 0, %s93
      %s97 = sphi 0, %s96
      %s113 = sphi 0, %s97
    $region4: #{tpu_custom_call.1} parent=1 // loop_header_branch
      %18 = sbr.rel (%p16) target = $region8
    $region5: #{tpu_custom_call.1} parent=1 // loop_body
      %s20 = ssub.s32 %s15, 1
      %s21 = ssub.s32 %s15, 2
      %s22 = sadd.s32 %s15, 1
      %s23 = ssub.s32 %s15, %s22
      %p24 = scmp.eq.s32.totalorder %s23, 0
      %s26 = sadd.s32 %s25, 1
      %s27 = scalar_select %p24, %s25, %s26
      %p30 = pneg %p24
      %p31 = scmp.eq.s32.totalorder %s15, 1
      %p32 = por %p30, %p31
      %p33 = scmp.ne.s32.totalorder %s25, %s28
      %p34 = scmp.eq.s32.totalorder %s15, 0
      %p35 = por %p33, %p34
      %p36 = scmp.ne.s32.totalorder %s25, %s28
      %p37 = scmp.eq.s32.totalorder %s20, 1
      %p38 = por %p36, %p37
      %p39 = scmp.ne.s32.totalorder %s28, %s29
      %p40 = scmp.eq.s32.totalorder %s20, 0
      %p41 = por %p39, %p40
      %p42 = scmp.ne.s32.totalorder %s28, %s29
      %p43 = scmp.eq.s32.totalorder %s21, 1
      %p44 = por %p42, %p43
      %p46 = scmp.ne.s32.totalorder %s29, %s45
      %p47 = scmp.eq.s32.totalorder %s21, 0
      %p48 = por %p46, %p47
      %s50 = sadd.s32 %s49, 1
      %p53 = scmp.eq.s32.totalorder %s15, 1
      %p54 = scmp.ne.s32.totalorder %s49, %s51
      %p55 = scmp.eq.s32.totalorder %s15, 0
      %p56 = por %p54, %p55
      %p57 = scmp.ne.s32.totalorder %s49, %s51
      %p58 = scmp.eq.s32.totalorder %s20, 1
      %p59 = por %p57, %p58
      %p60 = scmp.ne.s32.totalorder %s51, %s52
      %p61 = scmp.eq.s32.totalorder %s20, 0
      %p62 = por %p60, %p61
      %p63 = scmp.ne.s32.totalorder %s51, %s52
      %p64 = scmp.eq.s32.totalorder %s21, 1
      %p65 = por %p63, %p64
      %p67 = scmp.ne.s32.totalorder %s52, %s66
      %p68 = scmp.eq.s32.totalorder %s21, 0
      %p69 = por %p67, %p68
      %s71 = sadd.s32 %s70, 1
      %p74 = scmp.eq.s32.totalorder %s15, 1
      %p75 = scmp.ne.s32.totalorder %s70, %s72
      %p76 = scmp.eq.s32.totalorder %s15, 0
      %p77 = por %p75, %p76
      %p78 = scmp.ne.s32.totalorder %s70, %s72
      %p79 = scmp.eq.s32.totalorder %s20, 1
      %p80 = por %p78, %p79
      %p81 = scmp.ne.s32.totalorder %s72, %s73
      %p82 = scmp.eq.s32.totalorder %s20, 0
      %p83 = por %p81, %p82
      %p84 = scmp.ne.s32.totalorder %s72, %s73
      %p85 = scmp.eq.s32.totalorder %s21, 1
      %p86 = por %p84, %p85
      %p88 = scmp.ne.s32.totalorder %s73, %s87
      %p89 = scmp.eq.s32.totalorder %s21, 0
      %p90 = por %p88, %p89
      %s91 = ssub.s32 %s15, %s22
      %p92 = scmp.eq.s32.totalorder %s91, 0
      %s94 = sadd.s32 %s93, 1
      %s95 = scalar_select %p92, %s93, %s94
      %p98 = pneg %p92
      %p99 = scmp.eq.s32.totalorder %s15, 1
      %p100 = por %p98, %p99
      %p101 = scmp.ne.s32.totalorder %s93, %s96
      %p102 = scmp.eq.s32.totalorder %s15, 0
      %p103 = por %p101, %p102
      %p104 = scmp.ne.s32.totalorder %s93, %s96
      %p105 = scmp.eq.s32.totalorder %s20, 1
      %p106 = por %p104, %p105
      %p107 = scmp.ne.s32.totalorder %s96, %s97
      %p108 = scmp.eq.s32.totalorder %s20, 0
      %p109 = por %p107, %p108
      %p110 = scmp.ne.s32.totalorder %s96, %s97
      %p111 = scmp.eq.s32.totalorder %s21, 1
      %p112 = por %p110, %p111
      %p114 = scmp.ne.s32.totalorder %s97, %s113
      %p115 = scmp.eq.s32.totalorder %s21, 0
      %p116 = por %p114, %p115
      %p117 = scmp.le.s32.totalorder 1, %s15
      %p118 = scmp.lt.s32.totalorder %s15, 3
      %p119 = pnand %p117, %p118
      %p120 = pneg %p119
      // Predicated region
      $region9: #{tpu_custom_call.1} parent=5 // pred_check
        _
      $region10: #{tpu_custom_call.1} parent=5 // pred_check_branch
        %122 = sbr.rel (%p119) target = $region12
      $region11: #{tpu_custom_call.1} parent=5 // pred_region
        %s123 = ssub.s32 %s15, 1
        // Predicated region
        $region13: #{tpu_custom_call.1} parent=11 // pred_check
          %p124 = pneg %p62
        $region14: #{tpu_custom_call.1} parent=11 // pred_check_branch
          %126 = sbr.rel (%p124) target = $region16
        $region15: #{tpu_custom_call.1} parent=11 // pred_region
          _
        $region16: #{tpu_custom_call.1} parent=11 // pred_fallthru
          _
        // Predicated region
        $region17: #{tpu_custom_call.1} parent=11 // pred_check
          %p127 = pneg %p83
        $region18: #{tpu_custom_call.1} parent=11 // pred_check_branch
          %129 = sbr.rel (%p127) target = $region20
        $region19: #{tpu_custom_call.1} parent=11 // pred_region
          _
        $region20: #{tpu_custom_call.1} parent=11 // pred_fallthru
          _
      $region12: #{tpu_custom_call.1} parent=5 // pred_fallthru
        _
      %p130 = scmp.lt.s32.totalorder %s15, 2
      // Predicated region
      $region21: #{tpu_custom_call.1} parent=5 // pred_check
        %p131 = pneg %p130
      $region22: #{tpu_custom_call.1} parent=5 // pred_check_branch
        %133 = sbr.rel (%p131) target = $region24
      $region23: #{tpu_custom_call.1} parent=5 // pred_region
        // Predicated region
        $region25: #{tpu_custom_call.1} parent=23 // pred_check
          %p134 = pneg %p35
        $region26: #{tpu_custom_call.1} parent=23 // pred_check_branch
          %136 = sbr.rel (%p134) target = $region28
        $region27: #{tpu_custom_call.1} parent=23 // pred_region
          %s137 = sand.u32 %s25, 1
          %s138 = scalar_lea.sflag [#allocation3], %s137
          %s139 = sand.u32 %s25, 1
          %s140 = smul.addr %s139, 72
          %s141 = scalar_lea.vmem [#allocation2], %s140
          %s142 = smul.u32 3, %s15
          %s143 = ssub.s32 5, %s142
          %p144 = scmp.lt.s32.totalorder %s143, 3
          %s145 = scalar_select %p144, %s143, 3
          %s146 = smul.u32 128, %s145
          %s147 = smul.u32 %s146, 3
          %s149 = ssub.s32 1152, %s147
          %150 = vsyncadd %s138, %s149
          %p151 = scmp.ne.s32.totalorder 0, %s147
          %s152 = smul.addr %s142, 3
          %s153 = smul.addr %s152, 128
          %s154 = scalar_lea.hbm %s0, %s153
          %s155 = smul.u32 24, %s145
          %s156 = sshll.u32 %s141, 4
          %s157 = int_to_ptr.vmem [resolvable:$true] %s156
          %s158 = sshll.u32 %s155, 4
          %162 = dma.hbm_to_vmem [thread:$0]  (%p151), %s154, %s158, %s157, %s138, 384, 384, 24
        $region28: #{tpu_custom_call.1} parent=23 // pred_fallthru
          _
      $region24: #{tpu_custom_call.1} parent=5 // pred_fallthru
        _
      %p163 = scmp.le.s32.totalorder 1, %s15
      %p164 = scmp.lt.s32.totalorder %s15, 3
      %p165 = pnand %p163, %p164
      %p166 = pneg %p165
      // Predicated region
      $region29: #{tpu_custom_call.1} parent=5 // pred_check
        _
      $region30: #{tpu_custom_call.1} parent=5 // pred_check_branch
        %168 = sbr.rel (%p165) target = $region32
      $region31: #{tpu_custom_call.1} parent=5 // pred_region
        %s169 = ssub.s32 %s15, 1
        %s170 = sand.u32 %s28, 1
        %s171 = scalar_lea.sflag [#allocation3], %s170
        %s172 = sand.u32 %s28, 1
        %s173 = smul.addr %s172, 72
        %s174 = scalar_lea.vmem [#allocation2], %s173
        // Predicated region
        $region33: #{tpu_custom_call.1} parent=31 // pred_check
          %p175 = pneg %p41
        $region34: #{tpu_custom_call.1} parent=31 // pred_check_branch
          %177 = sbr.rel (%p175) target = $region36
        $region35: #{tpu_custom_call.1} parent=31 // pred_region
          %178 = dma.done %s171, 1152
        $region36: #{tpu_custom_call.1} parent=31 // pred_fallthru
          _
        %s179 = sand.u32 %s28, 1
        %s180 = scalar_lea.sflag [#allocation3], %s179
        %s181 = sand.u32 %s28, 1
        %s182 = smul.addr %s181, 72
        %s183 = scalar_lea.vmem [#allocation2], %s182
        %p184 = pneg %p41
        %p185 = pneg %p38
        %p186 = pneg %p62
        %p187 = pneg %p59
        %p188 = pneg %p83
        %p189 = pneg %p80
        %p190 = pneg %p109
        %p191 = pneg %p106
        %s192 = sand.u32 %s96, 1
        %s193 = scalar_lea.sflag [#allocation4], %s192
        %s194 = sand.u32 %s96, 1
        %s195 = smul.addr %s194, 72
        %s196 = scalar_lea.vmem [#allocation5], %s195
        %s197 = smul.u32 3, %s20
        %s198 = ssub.s32 5, %s197
        %p199 = scmp.lt.s32.totalorder %s198, 3
        %s200 = scalar_select %p199, %s198, 3
        %s201 = smul.u32 128, %s200
        %s202 = smul.u32 %s201, 3
        %s203 = smul.u32 3, %s20
        %s204 = ssub.s32 5, %s203
        %p205 = scmp.lt.s32.totalorder %s204, 3
        %s206 = scalar_select %p205, %s204, 3
        %s207 = smul.u32 128, %s206
        %s208 = smul.u32 %s207, 3
        %v209 = vld [vmem:[%s174] sm:$0xff]
        %v210 = vld [vmem:[%s174 + $0x8] sm:$0xff]
        %v211 = vld [vmem:[%s174 + $0x10] sm:$0xff]
        %v212 = vld [vmem:[%s174 + $0x18] sm:$0xff]
        %v213 = vld [vmem:[%s174 + $0x20] sm:$0xff]
        %v214 = vld [vmem:[%s174 + $0x28] sm:$0xff]
        %v215 = vld [vmem:[%s174 + $0x30] sm:$0xff]
        %v216 = vld [vmem:[%s174 + $0x38] sm:$0xff]
        %v217 = vld [vmem:[%s174 + $0x40] sm:$0xff]
        %v218 = vld [vmem:[%s1] sm:$0x1]
        %v219 = vld [vmem:[%s2] sm:$0x1]
        %vm220 = vcmask 785408
        %v221 = vsel %vm220, %v209, 0.0
        %222 = vadd.xlane.f32.xlu0 %v221
        %v223 = vpop.xlane.xlu0 %222
        %v224 = vsel %vm220, %v212, 0.0
        %225 = vadd.xlane.f32.xlu0 %v224
        %v226 = vpop.xlane.xlu0 %225
        %v227 = vsel %vm220, %v215, 0.0
        %228 = vadd.xlane.f32.xlu0 %v227
        %v229 = vpop.xlane.xlu0 %228
        %v230 = vrcp.pop 96.0
        %v231 = vmul.f32 %v223, %v230
        %v232 = vmul.f32 %v226, %v230
        %v233 = vmul.f32 %v229, %v230
        %v234 = vsub.f32 %v209, %v231
        %v235 = vsub.f32 %v212, %v232
        %v236 = vsub.f32 %v215, %v233
        %v237 = vmul.f32 %v234, %v234
        %v238 = vmul.f32 %v235, %v235
        %v239 = vmul.f32 %v236, %v236
        %v240 = vsel %vm220, %v237, 0.0
        %241 = vadd.xlane.f32.xlu0 %v240
        %v242 = vpop.xlane.xlu0 %241
        %v243 = vsel %vm220, %v238, 0.0
        %244 = vadd.xlane.f32.xlu0 %v243
        %v245 = vpop.xlane.xlu0 %244
        %v246 = vsel %vm220, %v239, 0.0
        %247 = vadd.xlane.f32.xlu0 %v246
        %v248 = vpop.xlane.xlu0 %247
        %v249 = vmul.f32 %v242, %v230
        %v250 = vmul.f32 %v245, %v230
        %v251 = vmul.f32 %v248, %v230
        %v252 = vadd.f32 %v249, 1e-06
        %v253 = vadd.f32 %v250, 1e-06
        %v254 = vadd.f32 %v251, 1e-06
        %v255 = vrsqrt.pop %v252
        %v256 = vrsqrt.pop %v253
        %v257 = vrsqrt.pop %v254
        %v258 = vmul.f32 %v234, %v255
        %v259 = vmul.f32 %v235, %v256
        %v260 = vmul.f32 %v236, %v257
        %v262 = vlaneseq
        %v263 = vshrl.u32 %v262, 7
        %v264 = vsub.s32 0, %v263
        %v265 = vrot.slane %v218, %v264
        %v267 = vmul.f32 %v258, %v265
        %v268 = vmul.f32 %v259, %v265
        %v269 = vmul.f32 %v260, %v265
        %v271 = vlaneseq
        %v272 = vshrl.u32 %v271, 7
        %v273 = vsub.s32 0, %v272
        %v274 = vrot.slane %v219, %v273
        %v276 = vadd.f32 %v267, %v274
        %v277 = vadd.f32 %v268, %v274
        %v278 = vadd.f32 %v269, %v274
        %285 = vrot.lane.b32.xlu0 %v209, 32
        %v286 = vpop.permute.xlu0 %285
        %287 = vrot.lane.b32.xlu0 %v210, 32
        %v288 = vpop.permute.xlu0 %287
        %289 = vrot.lane.b32.xlu0 %v212, 32
        %v290 = vpop.permute.xlu0 %289
        %291 = vrot.lane.b32.xlu0 %v213, 32
        %v292 = vpop.permute.xlu0 %291
        %293 = vrot.lane.b32.xlu0 %v215, 32
        %v294 = vpop.permute.xlu0 %293
        %295 = vrot.lane.b32.xlu0 %v216, 32
        %v296 = vpop.permute.xlu0 %295
        %vm297 = vcmask 261120
        %v298 = vsel %vm297, %v286, %v288
        %v299 = vsel %vm297, %v290, %v292
        %v300 = vsel %vm297, %v294, %v296
        %v304 = vsel %vm220, %v298, 0.0
        %305 = vadd.xlane.f32.xlu0 %v304
        %v306 = vpop.xlane.xlu0 %305
        %v307 = vsel %vm220, %v299, 0.0
        %308 = vadd.xlane.f32.xlu0 %v307
        %v309 = vpop.xlane.xlu0 %308
        %v310 = vsel %vm220, %v300, 0.0
        %311 = vadd.xlane.f32.xlu0 %v310
        %v312 = vpop.xlane.xlu0 %311
        %v313 = vmul.f32 %v306, %v230
        %v314 = vmul.f32 %v309, %v230
        %v315 = vmul.f32 %v312, %v230
        %v316 = vsub.f32 %v209, %v313
        %v317 = vsub.f32 %v210, %v313
        %v318 = vsub.f32 %v212, %v314
        %v319 = vsub.f32 %v213, %v314
        %v320 = vsub.f32 %v215, %v315
        %v321 = vsub.f32 %v216, %v315
        %v322 = vmul.f32 %v316, %v316
        %v323 = vmul.f32 %v317, %v317
        %v324 = vmul.f32 %v318, %v318
        %v325 = vmul.f32 %v319, %v319
        %v326 = vmul.f32 %v320, %v320
        %v327 = vmul.f32 %v321, %v321
        %334 = vrot.lane.b32.xlu0 %v322, 32
        %v335 = vpop.permute.xlu0 %334
        %336 = vrot.lane.b32.xlu0 %v323, 32
        %v337 = vpop.permute.xlu0 %336
        %338 = vrot.lane.b32.xlu0 %v324, 32
        %v339 = vpop.permute.xlu0 %338
        %340 = vrot.lane.b32.xlu0 %v325, 32
        %v341 = vpop.permute.xlu0 %340
        %342 = vrot.lane.b32.xlu0 %v326, 32
        %v343 = vpop.permute.xlu0 %342
        %344 = vrot.lane.b32.xlu0 %v327, 32
        %v345 = vpop.permute.xlu0 %344
        %v346 = vsel %vm297, %v335, %v337
        %v347 = vsel %vm297, %v339, %v341
        %v348 = vsel %vm297, %v343, %v345
        %v352 = vsel %vm220, %v346, 0.0
        %353 = vadd.xlane.f32.xlu0 %v352
        %v354 = vpop.xlane.xlu0 %353
        %v355 = vsel %vm220, %v347, 0.0
        %356 = vadd.xlane.f32.xlu0 %v355
        %v357 = vpop.xlane.xlu0 %356
        %v358 = vsel %vm220, %v348, 0.0
        %359 = vadd.xlane.f32.xlu0 %v358
        %v360 = vpop.xlane.xlu0 %359
        %v361 = vmul.f32 %v354, %v230
        %v362 = vmul.f32 %v357, %v230
        %v363 = vmul.f32 %v360, %v230
        %v364 = vadd.f32 %v361, 1e-06
        %v365 = vadd.f32 %v362, 1e-06
        %v366 = vadd.f32 %v363, 1e-06
        %v367 = vrsqrt.pop %v364
        %v368 = vrsqrt.pop %v365
        %v369 = vrsqrt.pop %v366
        %v370 = vmul.f32 %v316, %v367
        %v371 = vmul.f32 %v317, %v367
        %v372 = vmul.f32 %v318, %v368
        %v373 = vmul.f32 %v319, %v368
        %v374 = vmul.f32 %v320, %v369
        %v375 = vmul.f32 %v321, %v369
        %376 = vrot.lane.b32.xlu0 %v265, 96
        %v377 = vpop.permute.xlu0 %376
        %v379 = vmul.f32 %v370, %v377
        %v380 = vmul.f32 %v371, %v377
        %v381 = vmul.f32 %v372, %v377
        %v382 = vmul.f32 %v373, %v377
        %v383 = vmul.f32 %v374, %v377
        %v384 = vmul.f32 %v375, %v377
        %385 = vrot.lane.b32.xlu0 %v274, 96
        %v386 = vpop.permute.xlu0 %385
        %v388 = vadd.f32 %v379, %v386
        %v389 = vadd.f32 %v380, %v386
        %v390 = vadd.f32 %v381, %v386
        %v391 = vadd.f32 %v382, %v386
        %v392 = vadd.f32 %v383, %v386
        %v393 = vadd.f32 %v384, %v386
        %397 = vrot.lane.b32.xlu0 %v210, 64
        %v398 = vpop.permute.xlu0 %397
        %399 = vrot.lane.b32.xlu0 %v211, 64
        %v400 = vpop.permute.xlu0 %399
        %401 = vrot.lane.b32.xlu0 %v213, 64
        %v402 = vpop.permute.xlu0 %401
        %403 = vrot.lane.b32.xlu0 %v214, 64
        %v404 = vpop.permute.xlu0 %403
        %405 = vrot.lane.b32.xlu0 %v216, 64
        %v406 = vpop.permute.xlu0 %405
        %407 = vrot.lane.b32.xlu0 %v217, 64
        %v408 = vpop.permute.xlu0 %407
        %vm409 = vcmask 523264
        %v410 = vsel %vm409, %v398, %v400
        %v411 = vsel %vm409, %v402, %v404
        %v412 = vsel %vm409, %v406, %v408
        %v416 = vsel %vm220, %v410, 0.0
        %417 = vadd.xlane.f32.xlu0 %v416
        %v418 = vpop.xlane.xlu0 %417
        %v419 = vsel %vm220, %v411, 0.0
        %420 = vadd.xlane.f32.xlu0 %v419
        %v421 = vpop.xlane.xlu0 %420
        %v422 = vsel %vm220, %v412, 0.0
        %423 = vadd.xlane.f32.xlu0 %v422
        %v424 = vpop.xlane.xlu0 %423
        %v425 = vmul.f32 %v418, %v230
        %v426 = vmul.f32 %v421, %v230
        %v427 = vmul.f32 %v424, %v230
        %v428 = vsub.f32 %v210, %v425
        %v429 = vsub.f32 %v211, %v425
        %v430 = vsub.f32 %v213, %v426
        %v431 = vsub.f32 %v214, %v426
        %v432 = vsub.f32 %v216, %v427
        %v433 = vsub.f32 %v217, %v427
        %v434 = vmul.f32 %v428, %v428
        %v435 = vmul.f32 %v429, %v429
        %v436 = vmul.f32 %v430, %v430
        %v437 = vmul.f32 %v431, %v431
        %v438 = vmul.f32 %v432, %v432
        %v439 = vmul.f32 %v433, %v433
        %446 = vrot.lane.b32.xlu0 %v434, 64
        %v447 = vpop.permute.xlu0 %446
        %448 = vrot.lane.b32.xlu0 %v435, 64
        %v449 = vpop.permute.xlu0 %448
        %450 = vrot.lane.b32.xlu0 %v436, 64
        %v451 = vpop.permute.xlu0 %450
        %452 = vrot.lane.b32.xlu0 %v437, 64
        %v453 = vpop.permute.xlu0 %452
        %454 = vrot.lane.b32.xlu0 %v438, 64
        %v455 = vpop.permute.xlu0 %454
        %456 = vrot.lane.b32.xlu0 %v439, 64
        %v457 = vpop.permute.xlu0 %456
        %v458 = vsel %vm409, %v447, %v449
        %v459 = vsel %vm409, %v451, %v453
        %v460 = vsel %vm409, %v455, %v457
        %v464 = vsel %vm220, %v458, 0.0
        %465 = vadd.xlane.f32.xlu0 %v464
        %v466 = vpop.xlane.xlu0 %465
        %v467 = vsel %vm220, %v459, 0.0
        %468 = vadd.xlane.f32.xlu0 %v467
        %v469 = vpop.xlane.xlu0 %468
        %v470 = vsel %vm220, %v460, 0.0
        %471 = vadd.xlane.f32.xlu0 %v470
        %v472 = vpop.xlane.xlu0 %471
        %v473 = vmul.f32 %v466, %v230
        %v474 = vmul.f32 %v469, %v230
        %v475 = vmul.f32 %v472, %v230
        %v476 = vadd.f32 %v473, 1e-06
        %v477 = vadd.f32 %v474, 1e-06
        %v478 = vadd.f32 %v475, 1e-06
        %v479 = vrsqrt.pop %v476
        %v480 = vrsqrt.pop %v477
        %v481 = vrsqrt.pop %v478
        %v482 = vmul.f32 %v428, %v479
        %v483 = vmul.f32 %v429, %v479
        %v484 = vmul.f32 %v430, %v480
        %v485 = vmul.f32 %v431, %v480
        %v486 = vmul.f32 %v432, %v481
        %v487 = vmul.f32 %v433, %v481
        %488 = vrot.lane.b32.xlu0 %v265, 64
        %v489 = vpop.permute.xlu0 %488
        %v491 = vmul.f32 %v482, %v489
        %v492 = vmul.f32 %v483, %v489
        %v493 = vmul.f32 %v484, %v489
        %v494 = vmul.f32 %v485, %v489
        %v495 = vmul.f32 %v486, %v489
        %v496 = vmul.f32 %v487, %v489
        %497 = vrot.lane.b32.xlu0 %v274, 64
        %v498 = vpop.permute.xlu0 %497
        %v500 = vadd.f32 %v491, %v498
        %v501 = vadd.f32 %v492, %v498
        %v502 = vadd.f32 %v493, %v498
        %v503 = vadd.f32 %v494, %v498
        %v504 = vadd.f32 %v495, %v498
        %v505 = vadd.f32 %v496, %v498
        %506 = vrot.lane.b32.xlu0 %v211, 96
        %v507 = vpop.permute.xlu0 %506
        %508 = vrot.lane.b32.xlu0 %v214, 96
        %v509 = vpop.permute.xlu0 %508
        %510 = vrot.lane.b32.xlu0 %v217, 96
        %v511 = vpop.permute.xlu0 %510
        %v515 = vsel %vm220, %v507, 0.0
        %516 = vadd.xlane.f32.xlu0 %v515
        %v517 = vpop.xlane.xlu0 %516
        %v518 = vsel %vm220, %v509, 0.0
        %519 = vadd.xlane.f32.xlu0 %v518
        %v520 = vpop.xlane.xlu0 %519
        %v521 = vsel %vm220, %v511, 0.0
        %522 = vadd.xlane.f32.xlu0 %v521
        %v523 = vpop.xlane.xlu0 %522
        %v524 = vmul.f32 %v517, %v230
        %v525 = vmul.f32 %v520, %v230
        %v526 = vmul.f32 %v523, %v230
        %v527 = vsub.f32 %v211, %v524
        %v528 = vsub.f32 %v214, %v525
        %v529 = vsub.f32 %v217, %v526
        %v530 = vmul.f32 %v527, %v527
        %v531 = vmul.f32 %v528, %v528
        %v532 = vmul.f32 %v529, %v529
        %536 = vrot.lane.b32.xlu0 %v530, 96
        %v537 = vpop.permute.xlu0 %536
        %538 = vrot.lane.b32.xlu0 %v531, 96
        %v539 = vpop.permute.xlu0 %538
        %540 = vrot.lane.b32.xlu0 %v532, 96
        %v541 = vpop.permute.xlu0 %540
        %v545 = vsel %vm220, %v537, 0.0
        %546 = vadd.xlane.f32.xlu0 %v545
        %v547 = vpop.xlane.xlu0 %546
        %v548 = vsel %vm220, %v539, 0.0
        %549 = vadd.xlane.f32.xlu0 %v548
        %v550 = vpop.xlane.xlu0 %549
        %v551 = vsel %vm220, %v541, 0.0
        %552 = vadd.xlane.f32.xlu0 %v551
        %v553 = vpop.xlane.xlu0 %552
        %v554 = vmul.f32 %v547, %v230
        %v555 = vmul.f32 %v550, %v230
        %v556 = vmul.f32 %v553, %v230
        %v557 = vadd.f32 %v554, 1e-06
        %v558 = vadd.f32 %v555, 1e-06
        %v559 = vadd.f32 %v556, 1e-06
        %v560 = vrsqrt.pop %v557
        %v561 = vrsqrt.pop %v558
        %v562 = vrsqrt.pop %v559
        %v563 = vmul.f32 %v527, %v560
        %v564 = vmul.f32 %v528, %v561
        %v565 = vmul.f32 %v529, %v562
        %566 = vrot.lane.b32.xlu0 %v265, 32
        %v567 = vpop.permute.xlu0 %566
        %v569 = vmul.f32 %v563, %v567
        %v570 = vmul.f32 %v564, %v567
        %v571 = vmul.f32 %v565, %v567
        %572 = vrot.lane.b32.xlu0 %v274, 32
        %v573 = vpop.permute.xlu0 %572
        %v575 = vadd.f32 %v569, %v573
        %v576 = vadd.f32 %v570, %v573
        %v577 = vadd.f32 %v571, %v573
        %v578 = vsel %vm220, %v276, %v388
        %v579 = vsel %vm220, %v277, %v390
        %v580 = vsel %vm220, %v278, %v392
        %v581 = vsel %vm409, %v389, %v500
        %v582 = vsel %vm409, %v391, %v502
        %v583 = vsel %vm409, %v393, %v504
        %v584 = vsel %vm297, %v501, %v575
        %v585 = vsel %vm297, %v503, %v576
        %v586 = vsel %vm297, %v505, %v577
        %587 = vst [vmem:[%s196] sm:$0xff] %v578
        %588 = vst [vmem:[%s196 + $0x8] sm:$0xff] %v581
        %589 = vst [vmem:[%s196 + $0x10] sm:$0xff] %v584
        %590 = vst [vmem:[%s196 + $0x18] sm:$0xff] %v579
        %591 = vst [vmem:[%s196 + $0x20] sm:$0xff] %v582
        %592 = vst [vmem:[%s196 + $0x28] sm:$0xff] %v585
        %593 = vst [vmem:[%s196 + $0x30] sm:$0xff] %v580
        %594 = vst [vmem:[%s196 + $0x38] sm:$0xff] %v583
        %595 = vst [vmem:[%s196 + $0x40] sm:$0xff] %v586
        %s596 = sand.u32 %s96, 1
        %s597 = scalar_lea.sflag [#allocation4], %s596
        %s598 = sand.u32 %s96, 1
        %s599 = smul.addr %s598, 72
        %s600 = scalar_lea.vmem [#allocation5], %s599
        // Predicated region
        $region37: #{tpu_custom_call.1} parent=31 // pred_check
          %p601 = pneg %p106
        $region38: #{tpu_custom_call.1} parent=31 // pred_check_branch
          %603 = sbr.rel (%p601) target = $region40
        $region39: #{tpu_custom_call.1} parent=31 // pred_region
          %s604 = smul.u32 3, %s20
          %s605 = ssub.s32 5, %s604
          %p606 = scmp.lt.s32.totalorder %s605, 3
          %s607 = scalar_select %p606, %s605, 3
          %s608 = smul.u32 128, %s607
          %s609 = smul.u32 %s608, 3
          %s611 = ssub.s32 1152, %s609
          %612 = vsyncadd %s597, %s611
          %p613 = scmp.ne.s32.totalorder 0, %s609
          %s614 = smul.addr %s604, 3
          %s615 = smul.addr %s614, 128
          %s616 = scalar_lea.hbm %s3, %s615
          %s617 = smul.u32 24, %s607
          %s618 = sshll.u32 %s600, 4
          %s619 = int_to_ptr.vmem [resolvable:$true] %s618
          %s620 = sshll.u32 %s617, 4
          %624 = dma.vmem_to_hbm [thread:$0]  (%p613), %s619, %s620, %s616, %s597, 384, 384, 24
        $region40: #{tpu_custom_call.1} parent=31 // pred_fallthru
          _
      $region32: #{tpu_custom_call.1} parent=5 // pred_fallthru
        _
      %p625 = scmp.le.s32.totalorder 2, %s15
      // Predicated region
      $region41: #{tpu_custom_call.1} parent=5 // pred_check
        %p626 = pneg %p625
      $region42: #{tpu_custom_call.1} parent=5 // pred_check_branch
        %628 = sbr.rel (%p626) target = $region44
      $region43: #{tpu_custom_call.1} parent=5 // pred_region
        %s629 = ssub.s32 %s15, 2
        // Predicated region
        $region45: #{tpu_custom_call.1} parent=43 // pred_check
          %p630 = pneg %p112
        $region46: #{tpu_custom_call.1} parent=43 // pred_check_branch
          %632 = sbr.rel (%p630) target = $region48
        $region47: #{tpu_custom_call.1} parent=43 // pred_region
          %s633 = sand.u32 %s97, 1
          %s634 = scalar_lea.sflag [#allocation4], %s633
          %s635 = sand.u32 %s97, 1
          %s636 = smul.addr %s635, 72
          %s637 = scalar_lea.vmem [#allocation5], %s636
          %638 = dma.done %s634, 1152
        $region48: #{tpu_custom_call.1} parent=43 // pred_fallthru
          _
      $region44: #{tpu_custom_call.1} parent=5 // pred_fallthru
        _
    $region6: #{tpu_custom_call.1} parent=1 // loop_footer
      %s19 = sadd.s32 1, %s15
    $region7: #{tpu_custom_call.1} parent=1 // loop_footer_branch
      %14 = sbr.rel target = $region3
    $region8: #{tpu_custom_call.1} parent=1 // loop_exit
      _
    %639 = vsyncpa [#allocation3], 1
    %s640 = scalar_lea.sflag [#allocation3], 1
    %641 = vsyncpa %s640, 1
    %642 = vsyncpa [#allocation4], 1
    %s643 = scalar_lea.sflag [#allocation4], 1
    %644 = vsyncpa %s643, 1

</llo_original>
